<compile_context>
chip_gen: v7x
topology: tpu7x:2x2x1
jax: 0.10.0
libtpu: 0.0.40
codegen_flags: <defaults>
</compile_context>

<pallas_src>
import numpy as np

import jax
import jax.numpy as jnp
from jax.experimental import pallas as pl
from jax.experimental.pallas import tpu as pltpu

# ---------------- configuration (synthetic, deterministic) ----------------
B = 2                 # batch of graphs (<= 8 so pooled output fits one vreg tile)
N = 16                # nodes per graph
D_MODEL = 32          # config['d_model']
D_HIDDEN = 32         # config['d_hidden']
NUM_CLASS = 4         # len(params.SP_LABELS)  (not provided; synthetic choice)
USE_RELU_ACT = True   # config['use_relu_act']
LANE = 128
BN = B * N
POOL_ROW = D_MODEL          # row offset of the pooling matrix in the param slab
BIAS_ROW = D_MODEL + 8      # row offset of the bias rows in the param slab
SLAB_ROWS = D_MODEL + 16    # 48 rows (multiple of 8)
SLAB_LANES = 3 * LANE       # 384 lanes: [W1 | W2 | Wc_pad] column blocks

assert B <= 8 and BN <= LANE and D_MODEL <= LANE and D_HIDDEN <= LANE and NUM_CLASS <= LANE
# TODO(synk): config['dropout'] is inference-identity here (no RNG dropout in kernel).


# ---------------------------- Pallas kernel --------------------------------
def _graphconv_classifier_kernel(a_ref, x_ref, p_ref, out_ref):
    """Whole-batch forward in one invocation.

    a_ref : (B, N, N)          per-graph normalized adjacency
    x_ref : (B*N, D)           node features, batch flattened
    p_ref : (48, 384)          packed params (see pack_params)
    out   : (8, 128)           lane/sublane-padded logits (rows<B, lanes<C valid)
    """
    x = x_ref[...]                                               # (BN, D)

    w1 = p_ref[0:D_MODEL, 0:D_HIDDEN]                            # (D, H)
    w2 = p_ref[0:D_HIDDEN, LANE:LANE + D_MODEL]                  # (H, D)
    wc_pad = p_ref[0:D_MODEL, 2 * LANE:3 * LANE]                 # (D, 128)
    pool8 = p_ref[POOL_ROW:POOL_ROW + 8, 0:BN]                   # (8, BN)
    b1 = p_ref[BIAS_ROW:BIAS_ROW + 1, 0:D_HIDDEN]                # (1, H)
    b2 = p_ref[BIAS_ROW + 1:BIAS_ROW + 2, 0:D_MODEL]             # (1, D)
    bc_pad = p_ref[BIAS_ROW:BIAS_ROW + 1, 2 * LANE:3 * LANE]     # (1, 128)

    def apply_adj(t):
        # Block-diagonal A application without materializing (BN, BN):
        # each graph's (N, N) adjacency hits its own row block.  B is tiny and
        # static, so this is an unrolled pair of MXU pushes + a sublane concat.
        parts = [
            jnp.dot(a_ref[g], t[g * N:(g + 1) * N, :],
                    preferred_element_type=jnp.float32)
            for g in range(B)
        ]
        return jnp.concatenate(parts, axis=0)

    # GraphConv layer 1:  relu(A @ (X @ W1) + b1)
    h = jnp.dot(x, w1, preferred_element_type=jnp.float32)       # (BN, H)
    h = apply_adj(h) + b1
    h = jnp.maximum(h, 0.0)

    # GraphConv layer 2:  A @ (H @ W2) + b2  (+ optional ReLU)
    h = jnp.dot(h, w2, preferred_element_type=jnp.float32)       # (BN, D)
    h = apply_adj(h) + b2
    if USE_RELU_ACT:
        h = jnp.maximum(h, 0.0)

    # mean over nodes (torch.mean(x, dim=1)) as an MXU matmul with the
    # precomputed 1/N block-row pooling matrix (rows >= B are zero).
    pooled = jnp.dot(pool8, h, preferred_element_type=jnp.float32)   # (8, D)

    # Classifier: lane-padded to a full (8, 128) tile -> unmasked vreg store.
    out_ref[...] = (
        jnp.dot(pooled, wc_pad, preferred_element_type=jnp.float32) + bc_pad
    )


# --------------------- one-time parameter packing (host) -------------------
def pack_params(w1, b1, w2, b2, wc, bc):
    """Pack all weights/biases + pooling matrix into ONE lane-dense slab.

    Done once at init with numpy -- nothing here runs in the jitted hot path.
    Layout (f32, shape (48, 384)):
      rows 0:D,  cols   0:H        W1
      rows 0:H,  cols 128:128+D    W2
      rows 0:D,  cols 256:256+C    Wc   (rest of the 128-lane block is zero)
      rows 32:40, cols   0:BN      pooling matrix (1/N block rows; rows>=B zero)
      row  40,   cols   0:H        b1
      row  41,   cols   0:D        b2
      row  40,   cols 256:256+C    bc   (rest zero)
    """
    w1 = np.asarray(w1, np.float32)
    b1 = np.asarray(b1, np.float32).reshape(-1)
    w2 = np.asarray(w2, np.float32)
    b2 = np.asarray(b2, np.float32).reshape(-1)
    wc = np.asarray(wc, np.float32)
    bc = np.asarray(bc, np.float32).reshape(-1)

    # Tie runtime shapes to the static constants the kernel slices with.
    assert w1.shape == (D_MODEL, D_HIDDEN), w1.shape
    assert w2.shape == (D_HIDDEN, D_MODEL), w2.shape
    assert wc.shape == (D_MODEL, NUM_CLASS), wc.shape
    assert b1.shape == (D_HIDDEN,) and b2.shape == (D_MODEL,) and bc.shape == (NUM_CLASS,)

    p = np.zeros((SLAB_ROWS, SLAB_LANES), np.float32)
    p[0:D_MODEL, 0:D_HIDDEN] = w1
    p[0:D_HIDDEN, LANE:LANE + D_MODEL] = w2
    p[0:D_MODEL, 2 * LANE:2 * LANE + NUM_CLASS] = wc
    for g in range(B):
        p[POOL_ROW + g, g * N:(g + 1) * N] = 1.0 / N
    p[BIAS_ROW, 0:D_HIDDEN] = b1
    p[BIAS_ROW + 1, 0:D_MODEL] = b2
    p[BIAS_ROW, 2 * LANE:2 * LANE + NUM_CLASS] = bc
    return jnp.asarray(p)


# ------------------------------ hot path ------------------------------------
@jax.jit
def graphconv_classifier(a_norm, n_feat, p_slab):
    # Only a metadata-only reshape + the pallas_call: no per-call packing ops.
    x_flat = n_feat.reshape(B * N, D_MODEL)
    vmem = pl.BlockSpec(memory_space=pltpu.MemorySpace.VMEM)
    out_padded = pl.pallas_call(
        _graphconv_classifier_kernel,
        out_shape=jax.ShapeDtypeStruct((8, LANE), jnp.float32),
        in_specs=[vmem, vmem, vmem],
        out_specs=vmem,
    )(a_norm, x_flat, p_slab)
    return out_padded[:B, :NUM_CLASS]                             # (B, C)


# ----------------------------- plain-JAX reference --------------------------
def reference(a_norm, n_feat, w1, b1, w2, b2, wc, bc):
    h = jnp.einsum("bij,bjd->bid", a_norm, n_feat @ w1) + b1
    h = jnp.maximum(h, 0.0)
    h = jnp.einsum("bij,bjd->bid", a_norm, h @ w2) + b2
    if USE_RELU_ACT:
        h = jnp.maximum(h, 0.0)
    pooled = jnp.mean(h, axis=1)                                  # (B, D)
    return pooled @ wc + bc


# ------------------------------ glue / setup --------------------------------
def make_normalized_adjacency(key, batch, n):
    """Random undirected graph w/ self loops, D^{-1/2} (A + I) D^{-1/2}."""
    raw = jax.random.bernoulli(key, p=0.3, shape=(batch, n, n)).astype(jnp.float32)
    sym = jnp.maximum(raw, jnp.swapaxes(raw, -1, -2))
    adj = jnp.maximum(sym, jnp.eye(n, dtype=jnp.float32)[None])   # add self loops
    deg = jnp.sum(adj, axis=-1)                                   # (B, N)
    d_inv_sqrt = 1.0 / jnp.sqrt(deg)
    return adj * d_inv_sqrt[:, :, None] * d_inv_sqrt[:, None, :]


if __name__ == "__main__":
    key = jax.random.PRNGKey(0)
    k_adj, k_feat, k_w1, k_b1, k_w2, k_b2, k_wc, k_bc = jax.random.split(key, 8)

    # inputs (the "graph": normalized adjacency + node features)
    a_norm = make_normalized_adjacency(k_adj, B, N)                       # (B, N, N)
    n_feat = jax.random.normal(k_feat, (B, N, D_MODEL), dtype=jnp.float32)

    # deterministic parameter init (synthetic; no checkpoint loading)
    w1 = jax.random.normal(k_w1, (D_MODEL, D_HIDDEN), jnp.float32) * (1.0 / jnp.sqrt(D_MODEL))
    b1 = 0.1 * jax.random.normal(k_b1, (D_HIDDEN,), jnp.float32)
    w2 = jax.random.normal(k_w2, (D_HIDDEN, D_MODEL), jnp.float32) * (1.0 / jnp.sqrt(D_HIDDEN))
    b2 = 0.1 * jax.random.normal(k_b2, (D_MODEL,), jnp.float32)
    wc = jax.random.normal(k_wc, (D_MODEL, NUM_CLASS), jnp.float32) * (1.0 / jnp.sqrt(D_MODEL))
    bc = 0.1 * jax.random.normal(k_bc, (NUM_CLASS,), jnp.float32)

    # one-time packing (init time, outside the hot path)
    p_slab = pack_params(w1, b1, w2, b2, wc, bc)

    out = graphconv_classifier(a_norm, n_feat, p_slab)
    out = jax.block_until_ready(out)

    ref = reference(a_norm, n_feat, w1, b1, w2, b2, wc, bc)
    assert out.shape == (B, NUM_CLASS), out.shape
    assert jnp.allclose(out, ref, atol=1e-4, rtol=1e-4), (out, ref)

    print("KERNEL_OK")
</pallas_src>

<mosaic_0001>
module attributes {stable_mosaic.version = 11 : i64} {
  func.func @_graphconv_classifier_kernel(%arg0: memref<2x16x16xf32, #tpu.memory_space<vmem>>, %arg1: memref<32x32xf32, #tpu.memory_space<vmem>>, %arg2: memref<48x384xf32, #tpu.memory_space<vmem>>, %arg3: memref<8x128xf32, #tpu.memory_space<vmem>>) attributes {dimension_semantics = [], scalar_prefetch = 0 : i64, scratch_operands = 0 : i64, tpu.core_type = #tpu.core_type<tc>} {
    %c0 = arith.constant 0 : index
    %c0_0 = arith.constant 0 : index
    %0 = vector.load %arg1[%c0, %c0_0] : memref<32x32xf32, #tpu.memory_space<vmem>>, vector<32x32xf32>
    %c0_1 = arith.constant 0 : index
    %c0_2 = arith.constant 0 : index
    %1 = vector.load %arg2[%c0_1, %c0_2] : memref<48x384xf32, #tpu.memory_space<vmem>>, vector<32x32xf32>
    %c0_3 = arith.constant 0 : index
    %c128 = arith.constant 128 : index
    %2 = vector.load %arg2[%c0_3, %c128] : memref<48x384xf32, #tpu.memory_space<vmem>>, vector<32x32xf32>
    %c0_4 = arith.constant 0 : index
    %c256 = arith.constant 256 : index
    %3 = vector.load %arg2[%c0_4, %c256] : memref<48x384xf32, #tpu.memory_space<vmem>>, vector<32x128xf32>
    %c32 = arith.constant 32 : index
    %c0_5 = arith.constant 0 : index
    %4 = vector.load %arg2[%c32, %c0_5] : memref<48x384xf32, #tpu.memory_space<vmem>>, vector<8x32xf32>
    %c40 = arith.constant 40 : index
    %c0_6 = arith.constant 0 : index
    %5 = vector.load %arg2[%c40, %c0_6] : memref<48x384xf32, #tpu.memory_space<vmem>>, vector<1x32xf32>
    %c41 = arith.constant 41 : index
    %c0_7 = arith.constant 0 : index
    %6 = vector.load %arg2[%c41, %c0_7] : memref<48x384xf32, #tpu.memory_space<vmem>>, vector<1x32xf32>
    %c40_8 = arith.constant 40 : index
    %c256_9 = arith.constant 256 : index
    %7 = vector.load %arg2[%c40_8, %c256_9] : memref<48x384xf32, #tpu.memory_space<vmem>>, vector<1x128xf32>
    %cst = arith.constant dense<0.000000e+00> : vector<32x32xf32>
    %8 = tpu.matmul %0, %1, %cst {dimension_numbers = #tpu.dot_dimension_numbers<[1], [0], [0], [1], [0, 0, 1, 1], [], []>} : vector<32x32xf32>, vector<32x32xf32>, vector<32x32xf32> -> vector<32x32xf32>
    %c0_10 = arith.constant 0 : index
    %c0_11 = arith.constant 0 : index
    %c0_12 = arith.constant 0 : index
    %9 = vector.load %arg0[%c0_10, %c0_11, %c0_12] : memref<2x16x16xf32, #tpu.memory_space<vmem>>, vector<1x16x16xf32>
    %10 = vector.shape_cast %9 : vector<1x16x16xf32> to vector<16x16xf32>
    %11 = vector.extract_strided_slice %8 {offsets = [0, 0], sizes = [16, 32], strides = [1, 1]} : vector<32x32xf32> to vector<16x32xf32>
    %cst_13 = arith.constant dense<0.000000e+00> : vector<16x32xf32>
    %12 = tpu.matmul %10, %11, %cst_13 {dimension_numbers = #tpu.dot_dimension_numbers<[1], [0], [0], [1], [0, 0, 1, 1], [], []>} : vector<16x16xf32>, vector<16x32xf32>, vector<16x32xf32> -> vector<16x32xf32>
    %c1 = arith.constant 1 : index
    %c0_14 = arith.constant 0 : index
    %c0_15 = arith.constant 0 : index
    %13 = vector.load %arg0[%c1, %c0_14, %c0_15] : memref<2x16x16xf32, #tpu.memory_space<vmem>>, vector<1x16x16xf32>
    %14 = vector.shape_cast %13 : vector<1x16x16xf32> to vector<16x16xf32>
    %15 = vector.extract_strided_slice %8 {offsets = [16, 0], sizes = [16, 32], strides = [1, 1]} : vector<32x32xf32> to vector<16x32xf32>
    %cst_16 = arith.constant dense<0.000000e+00> : vector<16x32xf32>
    %16 = tpu.matmul %14, %15, %cst_16 {dimension_numbers = #tpu.dot_dimension_numbers<[1], [0], [0], [1], [0, 0, 1, 1], [], []>} : vector<16x16xf32>, vector<16x32xf32>, vector<16x32xf32> -> vector<16x32xf32>
    %17 = tpu.concatenate %12, %16 in 0 : vector<16x32xf32>, vector<16x32xf32> -> vector<32x32xf32>
    %18 = vector.broadcast %5 : vector<1x32xf32> to vector<32x32xf32>
    %19 = arith.addf %17, %18 : vector<32x32xf32>
    %cst_17 = arith.constant 0.000000e+00 : f32
    %20 = vector.broadcast %cst_17 : f32 to vector<32x32xf32>
    %21 = arith.maximumf %19, %20 : vector<32x32xf32>
    %cst_18 = arith.constant dense<0.000000e+00> : vector<32x32xf32>
    %22 = tpu.matmul %21, %2, %cst_18 {dimension_numbers = #tpu.dot_dimension_numbers<[1], [0], [0], [1], [0, 0, 1, 1], [], []>} : vector<32x32xf32>, vector<32x32xf32>, vector<32x32xf32> -> vector<32x32xf32>
    %c0_19 = arith.constant 0 : index
    %c0_20 = arith.constant 0 : index
    %c0_21 = arith.constant 0 : index
    %23 = vector.load %arg0[%c0_19, %c0_20, %c0_21] : memref<2x16x16xf32, #tpu.memory_space<vmem>>, vector<1x16x16xf32>
    %24 = vector.shape_cast %23 : vector<1x16x16xf32> to vector<16x16xf32>
    %25 = vector.extract_strided_slice %22 {offsets = [0, 0], sizes = [16, 32], strides = [1, 1]} : vector<32x32xf32> to vector<16x32xf32>
    %cst_22 = arith.constant dense<0.000000e+00> : vector<16x32xf32>
    %26 = tpu.matmul %24, %25, %cst_22 {dimension_numbers = #tpu.dot_dimension_numbers<[1], [0], [0], [1], [0, 0, 1, 1], [], []>} : vector<16x16xf32>, vector<16x32xf32>, vector<16x32xf32> -> vector<16x32xf32>
    %c1_23 = arith.constant 1 : index
    %c0_24 = arith.constant 0 : index
    %c0_25 = arith.constant 0 : index
    %27 = vector.load %arg0[%c1_23, %c0_24, %c0_25] : memref<2x16x16xf32, #tpu.memory_space<vmem>>, vector<1x16x16xf32>
    %28 = vector.shape_cast %27 : vector<1x16x16xf32> to vector<16x16xf32>
    %29 = vector.extract_strided_slice %22 {offsets = [16, 0], sizes = [16, 32], strides = [1, 1]} : vector<32x32xf32> to vector<16x32xf32>
    %cst_26 = arith.constant dense<0.000000e+00> : vector<16x32xf32>
    %30 = tpu.matmul %28, %29, %cst_26 {dimension_numbers = #tpu.dot_dimension_numbers<[1], [0], [0], [1], [0, 0, 1, 1], [], []>} : vector<16x16xf32>, vector<16x32xf32>, vector<16x32xf32> -> vector<16x32xf32>
    %31 = tpu.concatenate %26, %30 in 0 : vector<16x32xf32>, vector<16x32xf32> -> vector<32x32xf32>
    %32 = vector.broadcast %6 : vector<1x32xf32> to vector<32x32xf32>
    %33 = arith.addf %31, %32 : vector<32x32xf32>
    %cst_27 = arith.constant 0.000000e+00 : f32
    %34 = vector.broadcast %cst_27 : f32 to vector<32x32xf32>
    %35 = arith.maximumf %33, %34 : vector<32x32xf32>
    %cst_28 = arith.constant dense<0.000000e+00> : vector<8x32xf32>
    %36 = tpu.matmul %4, %35, %cst_28 {dimension_numbers = #tpu.dot_dimension_numbers<[1], [0], [0], [1], [0, 0, 1, 1], [], []>} : vector<8x32xf32>, vector<32x32xf32>, vector<8x32xf32> -> vector<8x32xf32>
    %cst_29 = arith.constant dense<0.000000e+00> : vector<8x128xf32>
    %37 = tpu.matmul %36, %3, %cst_29 {dimension_numbers = #tpu.dot_dimension_numbers<[1], [0], [0], [1], [0, 0, 1, 1], [], []>} : vector<8x32xf32>, vector<32x128xf32>, vector<8x128xf32> -> vector<8x128xf32>
    %38 = vector.broadcast %7 : vector<1x128xf32> to vector<8x128xf32>
    %39 = arith.addf %37, %38 : vector<8x128xf32>
    %c0_30 = arith.constant 0 : index
    %c0_31 = arith.constant 0 : index
    %40 = vector.load %arg3[%c0_30, %c0_31] : memref<8x128xf32, #tpu.memory_space<vmem>>, vector<8x128xf32>
    tpu.vector_store %arg3[%c0_30, %c0_31], %39 {strides = array<i32>} : memref<8x128xf32, #tpu.memory_space<vmem>>, vector<8x128xf32>,
    return
  }
}

</mosaic_0001>

<llo_original>
// kernel: graphconv_classifier.1
$region0: #{graphconv_classifier.1}
  #allocation0 [shape = 'u32[]', space=smem, size = 0x4, offset = 0x4, fixed_abs, tag = 'smem constant byte address 0x4 - core index']
  #allocation1 [shape = 'u32[144,128]{1,0:T(1,128)}', space=vmem, size = 0x12000, scoped, tag = 'internal scratch']
  %s0 = inlined_call_operand.hbm [shape: f32[2,16,16], index: 0, kind: input, shape index: {}]
  %s1 = inlined_call_operand.hbm [shape: f32[32,32], index: 1, kind: input, shape index: {}]
  %s2 = inlined_call_operand.hbm [shape: f32[48,384], index: 2, kind: input, shape index: {}]
  %s3 = inlined_call_operand.vmem [shape: f32[8,128], index: 3, kind: output, shape index: {}]
  %s4 = sld [smem:[#allocation0]]
  $region34: #{graphconv_classifier.1} parent=0
    _
  %s6 = ssub.s32 1, %s4
  %s7 = scalar_select 0, %s6, %s4
  $region1: #{graphconv_classifier.1} parent=0
    #allocation2 [shape = 'u8[16384]{0}', space=vmem, size = 0x4000, scoped, tag = 'input window, operand 0, single buffered']
    #allocation3 [shape = 's32[1]{0}', space=sflag, size = 0x4, scoped, tag = 'scoped memory for graphconv_classifier.1']
    #allocation4 [shape = 'u8[16384]{0}', space=vmem, size = 0x4000, scoped, tag = 'input window, operand 1, single buffered']
    #allocation5 [shape = 's32[1]{0}', space=sflag, size = 0x4, scoped, tag = 'scoped memory for graphconv_classifier.1']
    #allocation6 [shape = 'u8[73728]{0}', space=vmem, size = 0x12000, scoped, tag = 'input window, operand 2, single buffered']
    %8 = vsyncpa [#allocation3], 0
    %9 = vsyncpa [#allocation5], 0
    // Predicated region
    $region2: #{graphconv_classifier.1} parent=1 // pred_check
      _
    $region3: #{graphconv_classifier.1} parent=1 // pred_check_branch
      %11 = sbr.rel (0) target = $region5
    $region4: #{graphconv_classifier.1} parent=1 // pred_region
      %s13 = ssub.s32 512, 512
      %14 = vsyncadd [#allocation3], %s13
      %s15 = sshll.u32 [#allocation2], 4
      %s16 = int_to_ptr.vmem [resolvable:$true] %s15
      %21 = dma.hbm_to_vmem [thread:$0]  %s0, 512, %s16, [#allocation3], 128, 128, 8
    $region5: #{graphconv_classifier.1} parent=1 // pred_fallthru
      _
    // Predicated region
    $region6: #{graphconv_classifier.1} parent=1 // pred_check
      _
    $region7: #{graphconv_classifier.1} parent=1 // pred_check_branch
      %23 = sbr.rel (0) target = $region9
    $region8: #{graphconv_classifier.1} parent=1 // pred_region
      %s25 = ssub.s32 512, 512
      %26 = vsyncadd [#allocation5], %s25
      %s27 = sshll.u32 [#allocation4], 4
      %s28 = int_to_ptr.vmem [resolvable:$true] %s27
      %33 = dma.hbm_to_vmem [thread:$0]  %s1, 512, %s28, [#allocation5], 128, 128, 8
    $region9: #{graphconv_classifier.1} parent=1 // pred_fallthru
      _
    // Predicated region
    $region10: #{graphconv_classifier.1} parent=1 // pred_check
      _
    $region11: #{graphconv_classifier.1} parent=1 // pred_check_branch
      %35 = sbr.rel (0) target = $region13
    $region12: #{graphconv_classifier.1} parent=1 // pred_region
      %s37 = ssub.s32 2304, 2304
      %38 = vsyncadd [#allocation5], %s37
      %s39 = sshll.u32 [#allocation6], 4
      %s40 = int_to_ptr.vmem [resolvable:$true] %s39
      %45 = dma.hbm_to_vmem [thread:$0]  %s2, 2304, %s40, [#allocation5], 384, 384, 24
    $region13: #{graphconv_classifier.1} parent=1 // pred_fallthru
      _
    // Predicated region
    $region14: #{graphconv_classifier.1} parent=1 // pred_check
      _
    $region15: #{graphconv_classifier.1} parent=1 // pred_check_branch
      %47 = sbr.rel (0) target = $region17
    $region16: #{graphconv_classifier.1} parent=1 // pred_region
      %48 = dma.done [#allocation3], 512
    $region17: #{graphconv_classifier.1} parent=1 // pred_fallthru
      _
    // Predicated region
    $region18: #{graphconv_classifier.1} parent=1 // pred_check
      _
    $region19: #{graphconv_classifier.1} parent=1 // pred_check_branch
      %50 = sbr.rel (0) target = $region21
    $region20: #{graphconv_classifier.1} parent=1 // pred_region
      %51 = dma.done [#allocation5], 512
    $region21: #{graphconv_classifier.1} parent=1 // pred_fallthru
      _
    // Predicated region
    $region22: #{graphconv_classifier.1} parent=1 // pred_check
      _
    $region23: #{graphconv_classifier.1} parent=1 // pred_check_branch
      %53 = sbr.rel (0) target = $region25
    $region24: #{graphconv_classifier.1} parent=1 // pred_region
      %54 = dma.done [#allocation5], 2304
    $region25: #{graphconv_classifier.1} parent=1 // pred_fallthru
      _
    %v55 = vld [vmem:[#allocation4] sm:$0xff]
    %v56 = vld [vmem:[#allocation4 + $0x8] sm:$0xff]
    %v57 = vld [vmem:[#allocation4 + $0x10] sm:$0xff]
    %v58 = vld [vmem:[#allocation4 + $0x18] sm:$0xff]
    %v59 = vld [vmem:[#allocation6] sm:$0xff]
    %v60 = vld [vmem:[#allocation6 + $0x18] sm:$0xff]
    %v61 = vld [vmem:[#allocation6 + $0x30] sm:$0xff]
    %v62 = vld [vmem:[#allocation6 + $0x48] sm:$0xff]
    %v63 = vld [vmem:[#allocation6 + $0x8] sm:$0xff]
    %v64 = vld [vmem:[#allocation6 + $0x20] sm:$0xff]
    %v65 = vld [vmem:[#allocation6 + $0x38] sm:$0xff]
    %v66 = vld [vmem:[#allocation6 + $0x50] sm:$0xff]
    %v67 = vld [vmem:[#allocation6 + $0x10] sm:$0xff]
    %v68 = vld [vmem:[#allocation6 + $0x28] sm:$0xff]
    %v69 = vld [vmem:[#allocation6 + $0x40] sm:$0xff]
    %v70 = vld [vmem:[#allocation6 + $0x58] sm:$0xff]
    %v71 = vld [vmem:[#allocation6 + $0x60] sm:$0xff]
    %v72 = vld [vmem:[#allocation6 + $0x78] ss:$0 sm:$0xff]
    %v73 = vld [vmem:[#allocation6 + $0x79] ss:$0 sm:$0xff]
    %v74 = vld [vmem:[#allocation6 + $0x88] ss:$0 sm:$0xff]
    %vm75 = vcmask 261120
    %v77 = vsel %vm75, %v55, 0
    %v80 = vsel %vm75, %v56, 0
    %v83 = vsel %vm75, %v57, 0
    %v86 = vsel %vm75, %v58, 0
    %88 = vmatprep.subr.mxu0 0.0
    %89 = vmatpush1.msra.mxu0 %v59
    %90 = vmatprep.subr.mxu0 0.0
    %91 = vmatpush1.msra.mxu0 %v60
    %92 = vmatprep.subr.mxu0 0.0
    %93 = vmatpush1.msra.mxu0 %v61
    %94 = vmatprep.subr.mxu0 0.0
    %95 = vmatpush1.msra.mxu0 %v62
    %96 = vmatprep.subr.mxu0 0.0
    %97 = vmatpush1.msra.mxu0 0.0
    %98 = vmatprep.subr.mxu0 0.0
    %99 = vmatpush1.msra.mxu0 0.0
    %100 = vmatprep.subr.mxu0 0.0
    %101 = vmatpush1.msra.mxu0 0.0
    %102 = vmatprep.subr.mxu0 0.0
    %103 = vmatpush1.msra.mxu0 0.0
    %104 = vmatprep.subr.mxu0 0.0
    %105 = vmatpush1.msra.mxu0 0.0
    %106 = vmatprep.subr.mxu0 0.0
    %107 = vmatpush1.msra.mxu0 0.0
    %108 = vmatprep.subr.mxu0 0.0
    %109 = vmatpush1.msra.mxu0 0.0
    %110 = vmatprep.subr.mxu0 0.0
    %111 = vmatpush1.msra.mxu0 0.0
    %112 = vmatprep.subr.mxu0 0.0
    %113 = vmatpush1.msra.mxu0 0.0
    %114 = vmatprep.subr.mxu0 0.0
    %115 = vmatpush1.msra.mxu0 0.0
    %116 = vmatprep.subr.mxu0 0.0
    %117 = vmatpush1.msra.mxu0 0.0
    %118 = vmatprep.subr.mxu0 0.0
    %119 = vmatpush1.msra.mxu0 0.0
    %120 = vmatprep.subr.mxu0 0.0
    %121 = vmatpush1.msra.mxu0 0.0
    %122 = vmatprep.subr.mxu0 0.0
    %123 = vmatpush1.msra.mxu0 0.0
    %124 = vmatprep.subr.mxu0 0.0
    %125 = vmatpush1.msra.mxu0 0.0
    %126 = vmatprep.subr.mxu0 0.0
    %127 = vmatpush1.msra.mxu0 0.0
    %128 = vmatprep.subr.mxu0 0.0
    %129 = vmatpush1.msra.mxu0 0.0
    %130 = vmatprep.subr.mxu0 0.0
    %131 = vmatpush1.msra.mxu0 0.0
    %132 = vmatprep.subr.mxu0 0.0
    %133 = vmatpush1.msra.mxu0 0.0
    %134 = vmatprep.subr.mxu0 0.0
    %135 = vmatpush1.msra.mxu0 0.0
    %136 = vmatprep.subr.mxu0 0.0
    %137 = vmatpush1.msra.mxu0 0.0
    %138 = vmatprep.subr.mxu0 0.0
    %139 = vmatpush1.msra.mxu0 0.0
    %140 = vmatprep.subr.mxu0 0.0
    %141 = vmatpush1.msra.mxu0 0.0
    %142 = vmatprep.subr.mxu0 0.0
    %143 = vmatpush1.msra.mxu0 0.0
    %144 = vmatprep.subr.mxu0 0.0
    %145 = vmatpush1.msra.mxu0 0.0
    %146 = vmatprep.subr.mxu0 0.0
    %147 = vmatpush1.msra.mxu0 0.0
    %148 = vmatprep.subr.mxu0 0.0
    %149 = vmatpush1.msra.mxu0 0.0
    %150 = vmatprep.subr.mxu0 0.0
    %151 = vmatpush1.msra.mxu0 0.0
    %152 = vmatprep.mubr.f32.mxu0 0.0
    %153 = vmatmul.mubr.f32.gmra.mrb[0].mxu0 %v77
    %v154 = vpop.f32.mrb[0].mxu0
    %v155 = vadd.f32 0.0, %v154
    %v156 = vpop.f32.mrb[0].mxu0
    %157 = vmatprep.mubr.f32.mxu0 0.0
    %158 = vmatmul.mubr.f32.gmra.mrb[0].mxu0 %v80
    %v159 = vpop.f32.mrb[0].mxu0
    %v160 = vadd.f32 0.0, %v159
    %v161 = vpop.f32.mrb[0].mxu0
    %162 = vmatprep.mubr.f32.mxu0 0.0
    %163 = vmatmul.mubr.f32.gmra.mrb[0].mxu0 %v83
    %v164 = vpop.f32.mrb[0].mxu0
    %v165 = vadd.f32 0.0, %v164
    %v166 = vpop.f32.mrb[0].mxu0
    %167 = vmatprep.mubr.f32.mxu0 0.0
    %168 = vmatmul.mubr.f32.gmra.mrb[0].mxu0 %v86
    %v169 = vpop.f32.mrb[0].mxu0
    %v170 = vadd.f32 0.0, %v169
    %v171 = vpop.f32.mrb[0].mxu0
    %172 = vdwg.mxu0
    %v173 = vld [vmem:[#allocation2] sm:$0xff]
    %v174 = vld [vmem:[#allocation2 + $0x8] sm:$0xff]
    %vm175 = vcmask 130048
    %v177 = vsel %vm175, %v173, 0
    %v180 = vsel %vm175, %v174, 0
    %182 = vmatprep.subr.mxu0 0.0
    %183 = vmatpush1.msra.mxu0 %v155
    %184 = vmatprep.subr.mxu0 0.0
    %185 = vmatpush1.msra.mxu0 %v160
    %186 = vmatprep.subr.mxu0 0.0
    %187 = vmatpush1.msra.mxu0 0.0
    %188 = vmatprep.subr.mxu0 0.0
    %189 = vmatpush1.msra.mxu0 0.0
    %190 = vmatprep.subr.mxu0 0.0
    %191 = vmatpush1.msra.mxu0 0.0
    %192 = vmatprep.subr.mxu0 0.0
    %193 = vmatpush1.msra.mxu0 0.0
    %194 = vmatprep.subr.mxu0 0.0
    %195 = vmatpush1.msra.mxu0 0.0
    %196 = vmatprep.subr.mxu0 0.0
    %197 = vmatpush1.msra.mxu0 0.0
    %198 = vmatprep.subr.mxu0 0.0
    %199 = vmatpush1.msra.mxu0 0.0
    %200 = vmatprep.subr.mxu0 0.0
    %201 = vmatpush1.msra.mxu0 0.0
    %202 = vmatprep.subr.mxu0 0.0
    %203 = vmatpush1.msra.mxu0 0.0
    %204 = vmatprep.subr.mxu0 0.0
    %205 = vmatpush1.msra.mxu0 0.0
    %206 = vmatprep.subr.mxu0 0.0
    %207 = vmatpush1.msra.mxu0 0.0
    %208 = vmatprep.subr.mxu0 0.0
    %209 = vmatpush1.msra.mxu0 0.0
    %210 = vmatprep.subr.mxu0 0.0
    %211 = vmatpush1.msra.mxu0 0.0
    %212 = vmatprep.subr.mxu0 0.0
    %213 = vmatpush1.msra.mxu0 0.0
    %214 = vmatprep.subr.mxu0 0.0
    %215 = vmatpush1.msra.mxu0 0.0
    %216 = vmatprep.subr.mxu0 0.0
    %217 = vmatpush1.msra.mxu0 0.0
    %218 = vmatprep.subr.mxu0 0.0
    %219 = vmatpush1.msra.mxu0 0.0
    %220 = vmatprep.subr.mxu0 0.0
    %221 = vmatpush1.msra.mxu0 0.0
    %222 = vmatprep.subr.mxu0 0.0
    %223 = vmatpush1.msra.mxu0 0.0
    %224 = vmatprep.subr.mxu0 0.0
    %225 = vmatpush1.msra.mxu0 0.0
    %226 = vmatprep.subr.mxu0 0.0
    %227 = vmatpush1.msra.mxu0 0.0
    %228 = vmatprep.subr.mxu0 0.0
    %229 = vmatpush1.msra.mxu0 0.0
    %230 = vmatprep.subr.mxu0 0.0
    %231 = vmatpush1.msra.mxu0 0.0
    %232 = vmatprep.subr.mxu0 0.0
    %233 = vmatpush1.msra.mxu0 0.0
    %234 = vmatprep.subr.mxu0 0.0
    %235 = vmatpush1.msra.mxu0 0.0
    %236 = vmatprep.subr.mxu0 0.0
    %237 = vmatpush1.msra.mxu0 0.0
    %238 = vmatprep.subr.mxu0 0.0
    %239 = vmatpush1.msra.mxu0 0.0
    %240 = vmatprep.subr.mxu0 0.0
    %241 = vmatpush1.msra.mxu0 0.0
    %242 = vmatprep.subr.mxu0 0.0
    %243 = vmatpush1.msra.mxu0 0.0
    %244 = vmatprep.subr.mxu0 0.0
    %245 = vmatpush1.msra.mxu0 0.0
    %246 = vmatprep.mubr.f32.mxu0 0.0
    %247 = vmatmul.mubr.f32.gmra.mrb[0].mxu0 %v177
    %v248 = vpop.f32.mrb[0].mxu0
    %v249 = vadd.f32 0.0, %v248
    %v250 = vpop.f32.mrb[0].mxu0
    %251 = vmatprep.mubr.f32.mxu0 0.0
    %252 = vmatmul.mubr.f32.gmra.mrb[0].mxu0 %v180
    %v253 = vpop.f32.mrb[0].mxu0
    %v254 = vadd.f32 0.0, %v253
    %v255 = vpop.f32.mrb[0].mxu0
    %256 = vdwg.mxu0
    %s257 = scalar_lea.vmem [#allocation2], 16
    %v258 = vld [vmem:[%s257] sm:$0xff]
    %v259 = vld [vmem:[%s257 + $0x8] sm:$0xff]
    %v261 = vsel %vm175, %v258, 0
    %v264 = vsel %vm175, %v259, 0
    %266 = vmatprep.subr.mxu0 0.0
    %267 = vmatpush1.msra.mxu0 %v165
    %268 = vmatprep.subr.mxu0 0.0
    %269 = vmatpush1.msra.mxu0 %v170
    %270 = vmatprep.subr.mxu0 0.0
    %271 = vmatpush1.msra.mxu0 0.0
    %272 = vmatprep.subr.mxu0 0.0
    %273 = vmatpush1.msra.mxu0 0.0
    %274 = vmatprep.subr.mxu0 0.0
    %275 = vmatpush1.msra.mxu0 0.0
    %276 = vmatprep.subr.mxu0 0.0
    %277 = vmatpush1.msra.mxu0 0.0
    %278 = vmatprep.subr.mxu0 0.0
    %279 = vmatpush1.msra.mxu0 0.0
    %280 = vmatprep.subr.mxu0 0.0
    %281 = vmatpush1.msra.mxu0 0.0
    %282 = vmatprep.subr.mxu0 0.0
    %283 = vmatpush1.msra.mxu0 0.0
    %284 = vmatprep.subr.mxu0 0.0
    %285 = vmatpush1.msra.mxu0 0.0
    %286 = vmatprep.subr.mxu0 0.0
    %287 = vmatpush1.msra.mxu0 0.0
    %288 = vmatprep.subr.mxu0 0.0
    %289 = vmatpush1.msra.mxu0 0.0
    %290 = vmatprep.subr.mxu0 0.0
    %291 = vmatpush1.msra.mxu0 0.0
    %292 = vmatprep.subr.mxu0 0.0
    %293 = vmatpush1.msra.mxu0 0.0
    %294 = vmatprep.subr.mxu0 0.0
    %295 = vmatpush1.msra.mxu0 0.0
    %296 = vmatprep.subr.mxu0 0.0
    %297 = vmatpush1.msra.mxu0 0.0
    %298 = vmatprep.subr.mxu0 0.0
    %299 = vmatpush1.msra.mxu0 0.0
    %300 = vmatprep.subr.mxu0 0.0
    %301 = vmatpush1.msra.mxu0 0.0
    %302 = vmatprep.subr.mxu0 0.0
    %303 = vmatpush1.msra.mxu0 0.0
    %304 = vmatprep.subr.mxu0 0.0
    %305 = vmatpush1.msra.mxu0 0.0
    %306 = vmatprep.subr.mxu0 0.0
    %307 = vmatpush1.msra.mxu0 0.0
    %308 = vmatprep.subr.mxu0 0.0
    %309 = vmatpush1.msra.mxu0 0.0
    %310 = vmatprep.subr.mxu0 0.0
    %311 = vmatpush1.msra.mxu0 0.0
    %312 = vmatprep.subr.mxu0 0.0
    %313 = vmatpush1.msra.mxu0 0.0
    %314 = vmatprep.subr.mxu0 0.0
    %315 = vmatpush1.msra.mxu0 0.0
    %316 = vmatprep.subr.mxu0 0.0
    %317 = vmatpush1.msra.mxu0 0.0
    %318 = vmatprep.subr.mxu0 0.0
    %319 = vmatpush1.msra.mxu0 0.0
    %320 = vmatprep.subr.mxu0 0.0
    %321 = vmatpush1.msra.mxu0 0.0
    %322 = vmatprep.subr.mxu0 0.0
    %323 = vmatpush1.msra.mxu0 0.0
    %324 = vmatprep.subr.mxu0 0.0
    %325 = vmatpush1.msra.mxu0 0.0
    %326 = vmatprep.subr.mxu0 0.0
    %327 = vmatpush1.msra.mxu0 0.0
    %328 = vmatprep.subr.mxu0 0.0
    %329 = vmatpush1.msra.mxu0 0.0
    %330 = vmatprep.mubr.f32.mxu0 0.0
    %331 = vmatmul.mubr.f32.gmra.mrb[0].mxu0 %v261
    %v332 = vpop.f32.mrb[0].mxu0
    %v333 = vadd.f32 0.0, %v332
    %v334 = vpop.f32.mrb[0].mxu0
    %335 = vmatprep.mubr.f32.mxu0 0.0
    %336 = vmatmul.mubr.f32.gmra.mrb[0].mxu0 %v264
    %v337 = vpop.f32.mrb[0].mxu0
    %v338 = vadd.f32 0.0, %v337
    %v339 = vpop.f32.mrb[0].mxu0
    %340 = vdwg.mxu0
    %v341 = vadd.f32 %v249, %v72
    %v342 = vadd.f32 %v254, %v72
    %v343 = vadd.f32 %v333, %v72
    %v344 = vadd.f32 %v338, %v72
    %v345 = vmax.f32 %v341, 0.0
    %v346 = vmax.f32 %v342, 0.0
    %v347 = vmax.f32 %v343, 0.0
    %v348 = vmax.f32 %v344, 0.0
    %v350 = vsel %vm75, %v345, 0
    %v353 = vsel %vm75, %v346, 0
    %v356 = vsel %vm75, %v347, 0
    %v359 = vsel %vm75, %v348, 0
    %361 = vmatprep.subr.mxu0 0.0
    %362 = vmatpush1.msra.mxu0 %v63
    %363 = vmatprep.subr.mxu0 0.0
    %364 = vmatpush1.msra.mxu0 %v64
    %365 = vmatprep.subr.mxu0 0.0
    %366 = vmatpush1.msra.mxu0 %v65
    %367 = vmatprep.subr.mxu0 0.0
    %368 = vmatpush1.msra.mxu0 %v66
    %369 = vmatprep.subr.mxu0 0.0
    %370 = vmatpush1.msra.mxu0 0.0
    %371 = vmatprep.subr.mxu0 0.0
    %372 = vmatpush1.msra.mxu0 0.0
    %373 = vmatprep.subr.mxu0 0.0
    %374 = vmatpush1.msra.mxu0 0.0
    %375 = vmatprep.subr.mxu0 0.0
    %376 = vmatpush1.msra.mxu0 0.0
    %377 = vmatprep.subr.mxu0 0.0
    %378 = vmatpush1.msra.mxu0 0.0
    %379 = vmatprep.subr.mxu0 0.0
    %380 = vmatpush1.msra.mxu0 0.0
    %381 = vmatprep.subr.mxu0 0.0
    %382 = vmatpush1.msra.mxu0 0.0
    %383 = vmatprep.subr.mxu0 0.0
    %384 = vmatpush1.msra.mxu0 0.0
    %385 = vmatprep.subr.mxu0 0.0
    %386 = vmatpush1.msra.mxu0 0.0
    %387 = vmatprep.subr.mxu0 0.0
    %388 = vmatpush1.msra.mxu0 0.0
    %389 = vmatprep.subr.mxu0 0.0
    %390 = vmatpush1.msra.mxu0 0.0
    %391 = vmatprep.subr.mxu0 0.0
    %392 = vmatpush1.msra.mxu0 0.0
    %393 = vmatprep.subr.mxu0 0.0
    %394 = vmatpush1.msra.mxu0 0.0
    %395 = vmatprep.subr.mxu0 0.0
    %396 = vmatpush1.msra.mxu0 0.0
    %397 = vmatprep.subr.mxu0 0.0
    %398 = vmatpush1.msra.mxu0 0.0
    %399 = vmatprep.subr.mxu0 0.0
    %400 = vmatpush1.msra.mxu0 0.0
    %401 = vmatprep.subr.mxu0 0.0
    %402 = vmatpush1.msra.mxu0 0.0
    %403 = vmatprep.subr.mxu0 0.0
    %404 = vmatpush1.msra.mxu0 0.0
    %405 = vmatprep.subr.mxu0 0.0
    %406 = vmatpush1.msra.mxu0 0.0
    %407 = vmatprep.subr.mxu0 0.0
    %408 = vmatpush1.msra.mxu0 0.0
    %409 = vmatprep.subr.mxu0 0.0
    %410 = vmatpush1.msra.mxu0 0.0
    %411 = vmatprep.subr.mxu0 0.0
    %412 = vmatpush1.msra.mxu0 0.0
    %413 = vmatprep.subr.mxu0 0.0
    %414 = vmatpush1.msra.mxu0 0.0
    %415 = vmatprep.subr.mxu0 0.0
    %416 = vmatpush1.msra.mxu0 0.0
    %417 = vmatprep.subr.mxu0 0.0
    %418 = vmatpush1.msra.mxu0 0.0
    %419 = vmatprep.subr.mxu0 0.0
    %420 = vmatpush1.msra.mxu0 0.0
    %421 = vmatprep.subr.mxu0 0.0
    %422 = vmatpush1.msra.mxu0 0.0
    %423 = vmatprep.subr.mxu0 0.0
    %424 = vmatpush1.msra.mxu0 0.0
    %425 = vmatprep.mubr.f32.mxu0 0.0
    %426 = vmatmul.mubr.f32.gmra.mrb[0].mxu0 %v350
    %v427 = vpop.f32.mrb[0].mxu0
    %v428 = vadd.f32 0.0, %v427
    %v429 = vpop.f32.mrb[0].mxu0
    %430 = vmatprep.mubr.f32.mxu0 0.0
    %431 = vmatmul.mubr.f32.gmra.mrb[0].mxu0 %v353
    %v432 = vpop.f32.mrb[0].mxu0
    %v433 = vadd.f32 0.0, %v432
    %v434 = vpop.f32.mrb[0].mxu0
    %435 = vmatprep.mubr.f32.mxu0 0.0
    %436 = vmatmul.mubr.f32.gmra.mrb[0].mxu0 %v356
    %v437 = vpop.f32.mrb[0].mxu0
    %v438 = vadd.f32 0.0, %v437
    %v439 = vpop.f32.mrb[0].mxu0
    %440 = vmatprep.mubr.f32.mxu0 0.0
    %441 = vmatmul.mubr.f32.gmra.mrb[0].mxu0 %v359
    %v442 = vpop.f32.mrb[0].mxu0
    %v443 = vadd.f32 0.0, %v442
    %v444 = vpop.f32.mrb[0].mxu0
    %445 = vdwg.mxu0
    %446 = vmatprep.subr.mxu0 0.0
    %447 = vmatpush1.msra.mxu0 %v428
    %448 = vmatprep.subr.mxu0 0.0
    %449 = vmatpush1.msra.mxu0 %v433
    %450 = vmatprep.subr.mxu0 0.0
    %451 = vmatpush1.msra.mxu0 0.0
    %452 = vmatprep.subr.mxu0 0.0
    %453 = vmatpush1.msra.mxu0 0.0
    %454 = vmatprep.subr.mxu0 0.0
    %455 = vmatpush1.msra.mxu0 0.0
    %456 = vmatprep.subr.mxu0 0.0
    %457 = vmatpush1.msra.mxu0 0.0
    %458 = vmatprep.subr.mxu0 0.0
    %459 = vmatpush1.msra.mxu0 0.0
    %460 = vmatprep.subr.mxu0 0.0
    %461 = vmatpush1.msra.mxu0 0.0
    %462 = vmatprep.subr.mxu0 0.0
    %463 = vmatpush1.msra.mxu0 0.0
    %464 = vmatprep.subr.mxu0 0.0
    %465 = vmatpush1.msra.mxu0 0.0
    %466 = vmatprep.subr.mxu0 0.0
    %467 = vmatpush1.msra.mxu0 0.0
    %468 = vmatprep.subr.mxu0 0.0
    %469 = vmatpush1.msra.mxu0 0.0
    %470 = vmatprep.subr.mxu0 0.0
    %471 = vmatpush1.msra.mxu0 0.0
    %472 = vmatprep.subr.mxu0 0.0
    %473 = vmatpush1.msra.mxu0 0.0
    %474 = vmatprep.subr.mxu0 0.0
    %475 = vmatpush1.msra.mxu0 0.0
    %476 = vmatprep.subr.mxu0 0.0
    %477 = vmatpush1.msra.mxu0 0.0
    %478 = vmatprep.subr.mxu0 0.0
    %479 = vmatpush1.msra.mxu0 0.0
    %480 = vmatprep.subr.mxu0 0.0
    %481 = vmatpush1.msra.mxu0 0.0
    %482 = vmatprep.subr.mxu0 0.0
    %483 = vmatpush1.msra.mxu0 0.0
    %484 = vmatprep.subr.mxu0 0.0
    %485 = vmatpush1.msra.mxu0 0.0
    %486 = vmatprep.subr.mxu0 0.0
    %487 = vmatpush1.msra.mxu0 0.0
    %488 = vmatprep.subr.mxu0 0.0
    %489 = vmatpush1.msra.mxu0 0.0
    %490 = vmatprep.subr.mxu0 0.0
    %491 = vmatpush1.msra.mxu0 0.0
    %492 = vmatprep.subr.mxu0 0.0
    %493 = vmatpush1.msra.mxu0 0.0
    %494 = vmatprep.subr.mxu0 0.0
    %495 = vmatpush1.msra.mxu0 0.0
    %496 = vmatprep.subr.mxu0 0.0
    %497 = vmatpush1.msra.mxu0 0.0
    %498 = vmatprep.subr.mxu0 0.0
    %499 = vmatpush1.msra.mxu0 0.0
    %500 = vmatprep.subr.mxu0 0.0
    %501 = vmatpush1.msra.mxu0 0.0
    %502 = vmatprep.subr.mxu0 0.0
    %503 = vmatpush1.msra.mxu0 0.0
    %504 = vmatprep.subr.mxu0 0.0
    %505 = vmatpush1.msra.mxu0 0.0
    %506 = vmatprep.subr.mxu0 0.0
    %507 = vmatpush1.msra.mxu0 0.0
    %508 = vmatprep.subr.mxu0 0.0
    %509 = vmatpush1.msra.mxu0 0.0
    %510 = vmatprep.mubr.f32.mxu0 0.0
    %511 = vmatmul.mubr.f32.gmra.mrb[0].mxu0 %v177
    %v512 = vpop.f32.mrb[0].mxu0
    %v513 = vadd.f32 0.0, %v512
    %v514 = vpop.f32.mrb[0].mxu0
    %515 = vmatprep.mubr.f32.mxu0 0.0
    %516 = vmatmul.mubr.f32.gmra.mrb[0].mxu0 %v180
    %v517 = vpop.f32.mrb[0].mxu0
    %v518 = vadd.f32 0.0, %v517
    %v519 = vpop.f32.mrb[0].mxu0
    %520 = vdwg.mxu0
    %521 = vmatprep.subr.mxu0 0.0
    %522 = vmatpush1.msra.mxu0 %v438
    %523 = vmatprep.subr.mxu0 0.0
    %524 = vmatpush1.msra.mxu0 %v443
    %525 = vmatprep.subr.mxu0 0.0
    %526 = vmatpush1.msra.mxu0 0.0
    %527 = vmatprep.subr.mxu0 0.0
    %528 = vmatpush1.msra.mxu0 0.0
    %529 = vmatprep.subr.mxu0 0.0
    %530 = vmatpush1.msra.mxu0 0.0
    %531 = vmatprep.subr.mxu0 0.0
    %532 = vmatpush1.msra.mxu0 0.0
    %533 = vmatprep.subr.mxu0 0.0
    %534 = vmatpush1.msra.mxu0 0.0
    %535 = vmatprep.subr.mxu0 0.0
    %536 = vmatpush1.msra.mxu0 0.0
    %537 = vmatprep.subr.mxu0 0.0
    %538 = vmatpush1.msra.mxu0 0.0
    %539 = vmatprep.subr.mxu0 0.0
    %540 = vmatpush1.msra.mxu0 0.0
    %541 = vmatprep.subr.mxu0 0.0
    %542 = vmatpush1.msra.mxu0 0.0
    %543 = vmatprep.subr.mxu0 0.0
    %544 = vmatpush1.msra.mxu0 0.0
    %545 = vmatprep.subr.mxu0 0.0
    %546 = vmatpush1.msra.mxu0 0.0
    %547 = vmatprep.subr.mxu0 0.0
    %548 = vmatpush1.msra.mxu0 0.0
    %549 = vmatprep.subr.mxu0 0.0
    %550 = vmatpush1.msra.mxu0 0.0
    %551 = vmatprep.subr.mxu0 0.0
    %552 = vmatpush1.msra.mxu0 0.0
    %553 = vmatprep.subr.mxu0 0.0
    %554 = vmatpush1.msra.mxu0 0.0
    %555 = vmatprep.subr.mxu0 0.0
    %556 = vmatpush1.msra.mxu0 0.0
    %557 = vmatprep.subr.mxu0 0.0
    %558 = vmatpush1.msra.mxu0 0.0
    %559 = vmatprep.subr.mxu0 0.0
    %560 = vmatpush1.msra.mxu0 0.0
    %561 = vmatprep.subr.mxu0 0.0
    %562 = vmatpush1.msra.mxu0 0.0
    %563 = vmatprep.subr.mxu0 0.0
    %564 = vmatpush1.msra.mxu0 0.0
    %565 = vmatprep.subr.mxu0 0.0
    %566 = vmatpush1.msra.mxu0 0.0
    %567 = vmatprep.subr.mxu0 0.0
    %568 = vmatpush1.msra.mxu0 0.0
    %569 = vmatprep.subr.mxu0 0.0
    %570 = vmatpush1.msra.mxu0 0.0
    %571 = vmatprep.subr.mxu0 0.0
    %572 = vmatpush1.msra.mxu0 0.0
    %573 = vmatprep.subr.mxu0 0.0
    %574 = vmatpush1.msra.mxu0 0.0
    %575 = vmatprep.subr.mxu0 0.0
    %576 = vmatpush1.msra.mxu0 0.0
    %577 = vmatprep.subr.mxu0 0.0
    %578 = vmatpush1.msra.mxu0 0.0
    %579 = vmatprep.subr.mxu0 0.0
    %580 = vmatpush1.msra.mxu0 0.0
    %581 = vmatprep.subr.mxu0 0.0
    %582 = vmatpush1.msra.mxu0 0.0
    %583 = vmatprep.subr.mxu0 0.0
    %584 = vmatpush1.msra.mxu0 0.0
    %585 = vmatprep.mubr.f32.mxu0 0.0
    %586 = vmatmul.mubr.f32.gmra.mrb[0].mxu0 %v261
    %v587 = vpop.f32.mrb[0].mxu0
    %v588 = vadd.f32 0.0, %v587
    %v589 = vpop.f32.mrb[0].mxu0
    %590 = vmatprep.mubr.f32.mxu0 0.0
    %591 = vmatmul.mubr.f32.gmra.mrb[0].mxu0 %v264
    %v592 = vpop.f32.mrb[0].mxu0
    %v593 = vadd.f32 0.0, %v592
    %v594 = vpop.f32.mrb[0].mxu0
    %595 = vdwg.mxu0
    %v596 = vadd.f32 %v513, %v73
    %v597 = vadd.f32 %v518, %v73
    %v598 = vadd.f32 %v588, %v73
    %v599 = vadd.f32 %v593, %v73
    %v600 = vmax.f32 %v596, 0.0
    %v601 = vmax.f32 %v597, 0.0
    %v602 = vmax.f32 %v598, 0.0
    %v603 = vmax.f32 %v599, 0.0
    %v605 = vsel %vm75, %v71, 0
    %607 = vmatprep.subr.mxu0 0.0
    %608 = vmatpush1.msra.mxu0 %v600
    %609 = vmatprep.subr.mxu0 0.0
    %610 = vmatpush1.msra.mxu0 %v601
    %611 = vmatprep.subr.mxu0 0.0
    %612 = vmatpush1.msra.mxu0 %v602
    %613 = vmatprep.subr.mxu0 0.0
    %614 = vmatpush1.msra.mxu0 %v603
    %615 = vmatprep.subr.mxu0 0.0
    %616 = vmatpush1.msra.mxu0 0.0
    %617 = vmatprep.subr.mxu0 0.0
    %618 = vmatpush1.msra.mxu0 0.0
    %619 = vmatprep.subr.mxu0 0.0
    %620 = vmatpush1.msra.mxu0 0.0
    %621 = vmatprep.subr.mxu0 0.0
    %622 = vmatpush1.msra.mxu0 0.0
    %623 = vmatprep.subr.mxu0 0.0
    %624 = vmatpush1.msra.mxu0 0.0
    %625 = vmatprep.subr.mxu0 0.0
    %626 = vmatpush1.msra.mxu0 0.0
    %627 = vmatprep.subr.mxu0 0.0
    %628 = vmatpush1.msra.mxu0 0.0
    %629 = vmatprep.subr.mxu0 0.0
    %630 = vmatpush1.msra.mxu0 0.0
    %631 = vmatprep.subr.mxu0 0.0
    %632 = vmatpush1.msra.mxu0 0.0
    %633 = vmatprep.subr.mxu0 0.0
    %634 = vmatpush1.msra.mxu0 0.0
    %635 = vmatprep.subr.mxu0 0.0
    %636 = vmatpush1.msra.mxu0 0.0
    %637 = vmatprep.subr.mxu0 0.0
    %638 = vmatpush1.msra.mxu0 0.0
    %639 = vmatprep.subr.mxu0 0.0
    %640 = vmatpush1.msra.mxu0 0.0
    %641 = vmatprep.subr.mxu0 0.0
    %642 = vmatpush1.msra.mxu0 0.0
    %643 = vmatprep.subr.mxu0 0.0
    %644 = vmatpush1.msra.mxu0 0.0
    %645 = vmatprep.subr.mxu0 0.0
    %646 = vmatpush1.msra.mxu0 0.0
    %647 = vmatprep.subr.mxu0 0.0
    %648 = vmatpush1.msra.mxu0 0.0
    %649 = vmatprep.subr.mxu0 0.0
    %650 = vmatpush1.msra.mxu0 0.0
    %651 = vmatprep.subr.mxu0 0.0
    %652 = vmatpush1.msra.mxu0 0.0
    %653 = vmatprep.subr.mxu0 0.0
    %654 = vmatpush1.msra.mxu0 0.0
    %655 = vmatprep.subr.mxu0 0.0
    %656 = vmatpush1.msra.mxu0 0.0
    %657 = vmatprep.subr.mxu0 0.0
    %658 = vmatpush1.msra.mxu0 0.0
    %659 = vmatprep.subr.mxu0 0.0
    %660 = vmatpush1.msra.mxu0 0.0
    %661 = vmatprep.subr.mxu0 0.0
    %662 = vmatpush1.msra.mxu0 0.0
    %663 = vmatprep.subr.mxu0 0.0
    %664 = vmatpush1.msra.mxu0 0.0
    %665 = vmatprep.subr.mxu0 0.0
    %666 = vmatpush1.msra.mxu0 0.0
    %667 = vmatprep.subr.mxu0 0.0
    %668 = vmatpush1.msra.mxu0 0.0
    %669 = vmatprep.subr.mxu0 0.0
    %670 = vmatpush1.msra.mxu0 0.0
    %671 = vmatprep.mubr.f32.mxu0 0.0
    %672 = vmatmul.mubr.f32.gmra.mrb[0].mxu0 %v605
    %v673 = vpop.f32.mrb[0].mxu0
    %v674 = vadd.f32 0.0, %v673
    %v675 = vpop.f32.mrb[0].mxu0
    %676 = vdwg.mxu0
    %v678 = vsel %vm75, %v674, 0
    %680 = vmatprep.subr.mxu0 0.0
    %681 = vmatpush1.msra.mxu0 %v67
    %682 = vmatprep.subr.mxu0 0.0
    %683 = vmatpush1.msra.mxu0 %v68
    %684 = vmatprep.subr.mxu0 0.0
    %685 = vmatpush1.msra.mxu0 %v69
    %686 = vmatprep.subr.mxu0 0.0
    %687 = vmatpush1.msra.mxu0 %v70
    %688 = vmatprep.subr.mxu0 0.0
    %689 = vmatpush1.msra.mxu0 0.0
    %690 = vmatprep.subr.mxu0 0.0
    %691 = vmatpush1.msra.mxu0 0.0
    %692 = vmatprep.subr.mxu0 0.0
    %693 = vmatpush1.msra.mxu0 0.0
    %694 = vmatprep.subr.mxu0 0.0
    %695 = vmatpush1.msra.mxu0 0.0
    %696 = vmatprep.subr.mxu0 0.0
    %697 = vmatpush1.msra.mxu0 0.0
    %698 = vmatprep.subr.mxu0 0.0
    %699 = vmatpush1.msra.mxu0 0.0
    %700 = vmatprep.subr.mxu0 0.0
    %701 = vmatpush1.msra.mxu0 0.0
    %702 = vmatprep.subr.mxu0 0.0
    %703 = vmatpush1.msra.mxu0 0.0
    %704 = vmatprep.subr.mxu0 0.0
    %705 = vmatpush1.msra.mxu0 0.0
    %706 = vmatprep.subr.mxu0 0.0
    %707 = vmatpush1.msra.mxu0 0.0
    %708 = vmatprep.subr.mxu0 0.0
    %709 = vmatpush1.msra.mxu0 0.0
    %710 = vmatprep.subr.mxu0 0.0
    %711 = vmatpush1.msra.mxu0 0.0
    %712 = vmatprep.subr.mxu0 0.0
    %713 = vmatpush1.msra.mxu0 0.0
    %714 = vmatprep.subr.mxu0 0.0
    %715 = vmatpush1.msra.mxu0 0.0
    %716 = vmatprep.subr.mxu0 0.0
    %717 = vmatpush1.msra.mxu0 0.0
    %718 = vmatprep.subr.mxu0 0.0
    %719 = vmatpush1.msra.mxu0 0.0
    %720 = vmatprep.subr.mxu0 0.0
    %721 = vmatpush1.msra.mxu0 0.0
    %722 = vmatprep.subr.mxu0 0.0
    %723 = vmatpush1.msra.mxu0 0.0
    %724 = vmatprep.subr.mxu0 0.0
    %725 = vmatpush1.msra.mxu0 0.0
    %726 = vmatprep.subr.mxu0 0.0
    %727 = vmatpush1.msra.mxu0 0.0
    %728 = vmatprep.subr.mxu0 0.0
    %729 = vmatpush1.msra.mxu0 0.0
    %730 = vmatprep.subr.mxu0 0.0
    %731 = vmatpush1.msra.mxu0 0.0
    %732 = vmatprep.subr.mxu0 0.0
    %733 = vmatpush1.msra.mxu0 0.0
    %734 = vmatprep.subr.mxu0 0.0
    %735 = vmatpush1.msra.mxu0 0.0
    %736 = vmatprep.subr.mxu0 0.0
    %737 = vmatpush1.msra.mxu0 0.0
    %738 = vmatprep.subr.mxu0 0.0
    %739 = vmatpush1.msra.mxu0 0.0
    %740 = vmatprep.subr.mxu0 0.0
    %741 = vmatpush1.msra.mxu0 0.0
    %742 = vmatprep.subr.mxu0 0.0
    %743 = vmatpush1.msra.mxu0 0.0
    %744 = vmatprep.mubr.f32.mxu0 0.0
    %745 = vmatmul.mubr.f32.gmra.mrb[0].mxu0 %v678
    %v746 = vpop.f32.mrb[0].mxu0
    %v747 = vadd.f32 %v74, %v746
    %v748 = vpop.f32.mrb[0].mxu0
    %749 = vdwg.mxu0
    %750 = vst [vmem:[%s3] sm:$0xff] %v747
    // Predicated region
    $region26: #{graphconv_classifier.1} parent=1 // pred_check
      _
    $region27: #{graphconv_classifier.1} parent=1 // pred_check_branch
      %752 = sbr.rel (0) target = $region29
    $region28: #{graphconv_classifier.1} parent=1 // pred_region
      _
    $region29: #{graphconv_classifier.1} parent=1 // pred_fallthru
      _
    // Predicated region
    $region30: #{graphconv_classifier.1} parent=1 // pred_check
      _
    $region31: #{graphconv_classifier.1} parent=1 // pred_check_branch
      %754 = sbr.rel (0) target = $region33
    $region32: #{graphconv_classifier.1} parent=1 // pred_region
      _
    $region33: #{graphconv_classifier.1} parent=1 // pred_fallthru
      _
    %755 = vsyncpa [#allocation3], 1
    %756 = vsyncpa [#allocation5], 1

</llo_original>
